<compile_context>
chip_gen: v7x
topology: tpu7x:2x2x1
jax: 0.10.0
libtpu: 0.0.40
codegen_flags: <defaults>
</compile_context>

<pallas_src>
import functools

import jax
import jax.numpy as jnp
from jax.experimental import pallas as pl
from jax.experimental.pallas import tpu as pltpu

EPS = 1e-5  # nn.InstanceNorm3d default eps (affine=False, no running stats)


def _round_up(v, m):
    return ((v + m - 1) // m) * m


def _pick_vmem_limit_bytes():
    """Per-generation scoped-VMEM cap: conservative on v7x (64 MiB physical VMEM),
    larger on v5e/v6e (128 MiB physical)."""
    cap = 64 * 1024 * 1024
    try:
        cap = int(getattr(pltpu.get_tpu_info(), "vmem_capacity_bytes", cap))
    except Exception:
        pass
    if cap >= 100 * 1024 * 1024:      # v5e / v6e class
        return 64 * 1024 * 1024
    return 40 * 1024 * 1024           # v7x class


# -----------------------------------------------------------------------------
# Fused path: conv (matmul) + stats + InstanceNorm + ReLU in one pallas_call.
# The (Coutp, Pp) per-sample output slab stays resident in VMEM across the P axis.
# -----------------------------------------------------------------------------
def fused_kernel(p_ref, w_ref, o_ref, sum_sc, sq_sc, *, tp, inv_p):
    # p_ref: (1, Kp, TP) bf16   w_ref: (Coutp, Kp) bf16
    # o_ref: (1, Coutp, Pp) f32 resident slab   sum_sc/sq_sc: (Coutp, 1) f32 scratch
    t = pl.program_id(1)

    @pl.when(t == 0)
    def _():
        sum_sc[...] = jnp.zeros_like(sum_sc)
        sq_sc[...] = jnp.zeros_like(sq_sc)

    # (Coutp, Kp) @ (Kp, TP) -> (Coutp, TP), f32 accumulation on the MXU.
    y = jnp.dot(w_ref[...], p_ref[0], preferred_element_type=jnp.float32)
    sum_sc[...] += jnp.sum(y, axis=-1, keepdims=True)
    sq_sc[...] += jnp.sum(y * y, axis=-1, keepdims=True)

    off = pl.multiple_of(t * tp, 128)
    o_ref[0, :, pl.ds(off, tp)] = y          # raw conv values stay in VMEM only

    @pl.when(t == pl.num_programs(1) - 1)
    def _():
        mean = sum_sc[...] * inv_p                                  # (Coutp, 1)
        var = jnp.maximum(sq_sc[...] * inv_p - mean * mean, 0.0)
        scale = jax.lax.rsqrt(var + EPS)
        shift = -mean * scale
        o_ref[0] = jnp.maximum(o_ref[0] * scale + shift, 0.0)       # norm + ReLU


# -----------------------------------------------------------------------------
# Two-pass fallback (per-sample slab too large for VMEM).
# -----------------------------------------------------------------------------
def conv_stats_kernel(p_ref, w_ref, y_ref, ssum_ref, ssq_ref):
    # Partial stats per (n, g): the g axis splits P across cores on v7x.
    @pl.when(pl.program_id(2) == 0)
    def _():
        ssum_ref[...] = jnp.zeros_like(ssum_ref)
        ssq_ref[...] = jnp.zeros_like(ssq_ref)

    y = jnp.dot(w_ref[...], p_ref[0], preferred_element_type=jnp.float32)  # (Coutp, TP)
    ssum_ref[0, 0] += jnp.sum(y, axis=-1, keepdims=True)
    ssq_ref[0, 0] += jnp.sum(y * y, axis=-1, keepdims=True)
    y_ref[0] = y.astype(y_ref.dtype)     # bf16 intermediate -> half the HBM traffic


def norm_relu_kernel(y_ref, ss_ref, o_ref):
    # Finalize: single FMA + ReLU, scale/shift precomputed in glue.
    y = y_ref[0].astype(jnp.float32)     # (Coutp, TP)
    scale = ss_ref[0, 0]                 # (Coutp, 1)
    shift = ss_ref[0, 1]                 # (Coutp, 1)
    o_ref[0] = jnp.maximum(y * scale + shift, 0.0).astype(o_ref.dtype)


def convolution_forward(x, weight, bias, stride, padding, *, tp=1024,
                        force_two_pass=False):
    """x: (N, Cin, D, H, W) f32 -> (N, Cout, Do, Ho, Wo) f32."""
    # Conv bias is mathematically cancelled by InstanceNorm(affine=False) mean
    # subtraction; accepted for API parity but never used.
    del bias

    N, Cin, D, H, W = x.shape
    Cout, _, KD, KH, KW = weight.shape
    s, p = stride, padding
    Do = (D + 2 * p - KD) // s + 1
    Ho = (H + 2 * p - KH) // s + 1
    Wo = (W + 2 * p - KW) // s + 1
    P = Do * Ho * Wo
    K = KD * KH * KW * Cin

    Coutp = _round_up(max(Cout, 16), 16)   # bf16 packs 16 sublanes per vreg
    Kp = _round_up(K, 128)                 # contraction dim padded to lane multiple
    TP = min(_round_up(tp, 128), _round_up(P, 128))
    nP = pl.cdiv(P, TP)

    vmem_limit = _pick_vmem_limit_bytes()
    # Fused-path VMEM budget: (possibly double-buffered) output slab + double-buffered
    # bf16 patch tile + weights.
    fused_bytes = (2 * Coutp * (nP * TP) * 4
                   + 2 * Kp * TP * 2
                   + 2 * Coutp * Kp * 2)
    use_fused = (not force_two_pass) and fused_bytes <= int(0.6 * vmem_limit)

    if use_fused:
        G = 1
        nT = nP
    else:
        # Split P into two parallel halves (per-half partial stats) so both v7x
        # TensorCores get work even when N == 1.
        G = 2 if nP >= 2 else 1
        nT = _round_up(nP, G)
    nTg = nT // G
    Pp = nT * TP
    inv_p = 1.0 / P

    # ---- glue (plain JAX): bf16 cast FIRST, then pad + im2col; K is taps-major /
    #      Cin-minor, output voxels P on the lane axis.  Zero-padded P columns
    #      contribute 0 to sum / sumsq, so stats (divided by the true P) stay exact.
    xp = jnp.pad(x.astype(jnp.bfloat16), ((0, 0), (0, 0), (p, p), (p, p), (p, p)))
    cols = []
    for kd in range(KD):
        for kh in range(KH):
            for kw in range(KW):
                cols.append(
                    xp[:, :, kd:kd + s * Do:s, kh:kh + s * Ho:s, kw:kw + s * Wo:s]
                )                                                   # (N, Cin, Do, Ho, Wo)
    patches = jnp.stack(cols, axis=1).reshape(N, K, P)
    patches = jnp.pad(patches, ((0, 0), (0, Kp - K), (0, Pp - P)))
    # TODO(synk): replace this HBM-materialized im2col with an in-kernel gather.

    w_flat = jnp.transpose(weight, (0, 2, 3, 4, 1)).reshape(Cout, K)    # same K order
    w_flat = jnp.pad(w_flat, ((0, Coutp - Cout), (0, Kp - K))).astype(jnp.bfloat16)

    if use_fused:
        out = pl.pallas_call(
            functools.partial(fused_kernel, tp=TP, inv_p=inv_p),
            out_shape=jax.ShapeDtypeStruct((N, Coutp, Pp), jnp.float32),
            grid_spec=pltpu.PrefetchScalarGridSpec(
                num_scalar_prefetch=0,
                grid=(N, nP),
                in_specs=[
                    pl.BlockSpec((1, Kp, TP), lambda n, t: (n, 0, t)),
                    pl.BlockSpec((Coutp, Kp), lambda n, t: (0, 0)),
                ],
                out_specs=pl.BlockSpec((1, Coutp, Pp), lambda n, t: (n, 0, 0)),
                scratch_shapes=[
                    pltpu.VMEM((Coutp, 1), jnp.float32),
                    pltpu.VMEM((Coutp, 1), jnp.float32),
                ],
            ),
            compiler_params=pltpu.CompilerParams(
                dimension_semantics=("parallel", "arbitrary"),
                vmem_limit_bytes=vmem_limit,
            ),
            cost_estimate=pl.CostEstimate(
                flops=2 * N * Coutp * Kp * Pp + 8 * N * Coutp * Pp,
                transcendentals=N * Coutp,
                bytes_accessed=patches.size * 2 + w_flat.size * 2 + N * Coutp * Pp * 4,
            ),
        )(patches, w_flat)
    else:
        # ---- pass 1: conv-as-matmul + per-(n, g) partial sum / sumsq ----
        y_raw, psum, psq = pl.pallas_call(
            conv_stats_kernel,
            out_shape=(
                jax.ShapeDtypeStruct((N, Coutp, Pp), jnp.bfloat16),
                jax.ShapeDtypeStruct((N, G, Coutp, 1), jnp.float32),
                jax.ShapeDtypeStruct((N, G, Coutp, 1), jnp.float32),
            ),
            grid_spec=pltpu.PrefetchScalarGridSpec(
                num_scalar_prefetch=0,
                grid=(N, G, nTg),
                in_specs=[
                    pl.BlockSpec((1, Kp, TP), lambda n, g, t: (n, 0, g * nTg + t)),
                    pl.BlockSpec((Coutp, Kp), lambda n, g, t: (0, 0)),
                ],
                out_specs=[
                    pl.BlockSpec((1, Coutp, TP), lambda n, g, t: (n, 0, g * nTg + t)),
                    pl.BlockSpec((1, 1, Coutp, 1), lambda n, g, t: (n, g, 0, 0)),
                    pl.BlockSpec((1, 1, Coutp, 1), lambda n, g, t: (n, g, 0, 0)),
                ],
            ),
            compiler_params=pltpu.CompilerParams(
                dimension_semantics=("parallel", "parallel", "arbitrary"),
                vmem_limit_bytes=vmem_limit,
            ),
            cost_estimate=pl.CostEstimate(
                flops=2 * N * Coutp * Kp * Pp + 4 * N * Coutp * Pp,
                transcendentals=0,
                bytes_accessed=patches.size * 2 + w_flat.size * 2
                + N * Coutp * Pp * 2 + 2 * N * G * Coutp * 4,
            ),
        )(patches, w_flat)

        # ---- glue: combine partial stats, precompute per-(n, c) scale / shift ----
        mean = psum.sum(axis=1) * inv_p                                   # (N, Coutp, 1)
        var = jnp.maximum(psq.sum(axis=1) * inv_p - mean * mean, 0.0)
        scale = jax.lax.rsqrt(var + EPS)
        ss = jnp.stack([scale, -mean * scale], axis=1)                    # (N, 2, Coutp, 1)

        # ---- pass 2: single FMA + ReLU, lane-dense ----
        out = pl.pallas_call(
            norm_relu_kernel,
            out_shape=jax.ShapeDtypeStruct((N, Coutp, Pp), jnp.float32),
            grid_spec=pltpu.PrefetchScalarGridSpec(
                num_scalar_prefetch=0,
                grid=(N, nT),
                in_specs=[
                    pl.BlockSpec((1, Coutp, TP), lambda n, t: (n, 0, t)),
                    pl.BlockSpec((1, 2, Coutp, 1), lambda n, t: (n, 0, 0, 0)),
                ],
                out_specs=pl.BlockSpec((1, Coutp, TP), lambda n, t: (n, 0, t)),
            ),
            compiler_params=pltpu.CompilerParams(
                dimension_semantics=("parallel", "parallel"),
                vmem_limit_bytes=vmem_limit,
            ),
            cost_estimate=pl.CostEstimate(
                flops=3 * N * Coutp * Pp,
                transcendentals=0,
                bytes_accessed=N * Coutp * Pp * (2 + 4) + 2 * N * Coutp * 4,
            ),
        )(y_raw, ss)

    # Lane-dense (N, Coutp, Pp) reshapes straight to NCDHW; drop channel/P padding.
    return out[:, :Cout, :P].reshape(N, Cout, Do, Ho, Wo)


def reference_forward(x, weight, bias, stride, padding):
    ref = jax.lax.conv_general_dilated(
        x, weight,
        window_strides=(stride,) * 3,
        padding=[(padding, padding)] * 3,
        dimension_numbers=("NCDHW", "OIDHW", "NCDHW"),
        precision=jax.lax.Precision.HIGHEST,
    )
    ref = ref + bias.reshape(1, -1, 1, 1, 1)
    mean = ref.mean(axis=(2, 3, 4), keepdims=True)
    var = ref.var(axis=(2, 3, 4), keepdims=True)  # biased, like InstanceNorm
    return jnp.maximum((ref - mean) * jax.lax.rsqrt(var + EPS), 0.0)


if __name__ == "__main__":
    N, Cin, Cout = 2, 4, 8
    D = H = W = 8
    KS, STRIDE, PAD = 3, 1, 1

    key = jax.random.PRNGKey(0)
    kx, kw, kb = jax.random.split(key, 3)
    x = jax.random.normal(kx, (N, Cin, D, H, W), jnp.float32)
    fan_in = Cin * KS * KS * KS
    weight = jax.random.normal(kw, (Cout, Cin, KS, KS, KS), jnp.float32) / jnp.sqrt(fan_in)
    bias = 0.1 * jax.random.normal(kb, (Cout,), jnp.float32)

    ref = reference_forward(x, weight, bias, STRIDE, PAD)

    # (a) default: fused single-pass, whole P in one tile.
    out_a = jax.block_until_ready(convolution_forward(x, weight, bias, STRIDE, PAD))
    # (b) fused single-pass, multiple P tiles (exercises resident-slab accumulation
    #     and the dynamic in-slab stores).
    out_b = jax.block_until_ready(
        convolution_forward(x, weight, bias, STRIDE, PAD, tp=128))
    # (c) two-pass fallback with the dual-core P split (exercises partial stats,
    #     bf16 intermediate and the FMA+ReLU finalize pass).
    out_c = jax.block_until_ready(
        convolution_forward(x, weight, bias, STRIDE, PAD, tp=256, force_two_pass=True))

    for out in (out_a, out_b, out_c):
        assert out.shape == ref.shape == (N, Cout, D, H, W)
        # Tolerance accounts for bf16 patch/weight/intermediate quantization
        # (all accumulation and normalization math is f32).
        assert jnp.allclose(out, ref, rtol=2e-2, atol=2e-2), "mismatch vs. JAX reference"

    print("KERNEL_OK")
</pallas_src>

<mosaic_0001>
module attributes {stable_mosaic.version = 11 : i64} {
  func.func @fused_kernel(%arg0: i32, %arg1: i32, %arg2: memref<1x128x512xbf16, #tpu.memory_space<vmem>>, %arg3: memref<16x128xbf16, #tpu.memory_space<vmem>>, %arg4: memref<1x16x512xf32, #tpu.memory_space<vmem>>, %arg5: memref<16x1xf32, #tpu.memory_space<vmem>>, %arg6: memref<16x1xf32, #tpu.memory_space<vmem>>) attributes {dimension_semantics = [#tpu.dimension_semantics<parallel>, #tpu.dimension_semantics<arbitrary>], iteration_bounds = array<i64: 2, 1>, scalar_prefetch = 0 : i64, scratch_operands = 2 : i64, tpu.core_type = #tpu.core_type<tc>, window_params = [{transform_indices = @transform_0, window_bounds = array<i64: 1, 128, 512>}, {pipeline_mode = #tpu.pipeline_mode<synchronous>, transform_indices = @transform_1, window_bounds = array<i64: 16, 128>}, {transform_indices = @transform_2, window_bounds = array<i64: 1, 16, 512>}]} {
    %c0_i32 = arith.constant 0 : i32
    %0 = arith.cmpi eq, %arg1, %c0_i32 : i32
    %1 = arith.extui %0 : i1 to i32
    %c0_i32_0 = arith.constant 0 : i32
    %2 = arith.cmpi ne, %1, %c0_i32_0 : i32
    scf.if %2 {
      %cst_19 = arith.constant 0.000000e+00 : f32
      %27 = vector.broadcast %cst_19 : f32 to vector<16x1xf32>
      %c0_20 = arith.constant 0 : index
      %c0_21 = arith.constant 0 : index
      %28 = vector.load %arg5[%c0_20, %c0_21] : memref<16x1xf32, #tpu.memory_space<vmem>>, vector<16x1xf32>
      tpu.vector_store %arg5[%c0_20, %c0_21], %27 {strides = array<i32>} : memref<16x1xf32, #tpu.memory_space<vmem>>, vector<16x1xf32>,
      %cst_22 = arith.constant 0.000000e+00 : f32
      %29 = vector.broadcast %cst_22 : f32 to vector<16x1xf32>
      %c0_23 = arith.constant 0 : index
      %c0_24 = arith.constant 0 : index
      %30 = vector.load %arg6[%c0_23, %c0_24] : memref<16x1xf32, #tpu.memory_space<vmem>>, vector<16x1xf32>
      tpu.vector_store %arg6[%c0_23, %c0_24], %29 {strides = array<i32>} : memref<16x1xf32, #tpu.memory_space<vmem>>, vector<16x1xf32>,
    } else {
    }
    %c0 = arith.constant 0 : index
    %c0_1 = arith.constant 0 : index
    %3 = vector.load %arg3[%c0, %c0_1] : memref<16x128xbf16, #tpu.memory_space<vmem>>, vector<16x128xbf16>
    %c0_2 = arith.constant 0 : index
    %c0_3 = arith.constant 0 : index
    %c0_4 = arith.constant 0 : index
    %4 = vector.load %arg2[%c0_2, %c0_3, %c0_4] : memref<1x128x512xbf16, #tpu.memory_space<vmem>>, vector<1x128x512xbf16>
    %5 = vector.shape_cast %4 : vector<1x128x512xbf16> to vector<128x512xbf16>
    %cst = arith.constant dense<0.000000e+00> : vector<16x512xf32>
    %6 = tpu.matmul %3, %5, %cst {dimension_numbers = #tpu.dot_dimension_numbers<[1], [0], [0], [1], [0, 0, 1, 1], [], []>} : vector<16x128xbf16>, vector<128x512xbf16>, vector<16x512xf32> -> vector<16x512xf32>
    %c0_5 = arith.constant 0 : index
    %c0_6 = arith.constant 0 : index
    %7 = vector.load %arg5[%c0_5, %c0_6] : memref<16x1xf32, #tpu.memory_space<vmem>>, vector<16x1xf32>
    %cst_7 = arith.constant dense<0.000000e+00> : vector<16xf32>
    %8 = vector.multi_reduction <add>, %6, %cst_7 [1] : vector<16x512xf32> to vector<16xf32>
    %9 = vector.shape_cast %8 : vector<16xf32> to vector<16x1xf32>
    %10 = arith.addf %7, %9 : vector<16x1xf32>
    %c0_8 = arith.constant 0 : index
    %c0_9 = arith.constant 0 : index
    %11 = vector.load %arg5[%c0_8, %c0_9] : memref<16x1xf32, #tpu.memory_space<vmem>>, vector<16x1xf32>
    tpu.vector_store %arg5[%c0_8, %c0_9], %10 {strides = array<i32>} : memref<16x1xf32, #tpu.memory_space<vmem>>, vector<16x1xf32>,
    %c0_10 = arith.constant 0 : index
    %c0_11 = arith.constant 0 : index
    %12 = vector.load %arg6[%c0_10, %c0_11] : memref<16x1xf32, #tpu.memory_space<vmem>>, vector<16x1xf32>
    %13 = arith.mulf %6, %6 : vector<16x512xf32>
    %cst_12 = arith.constant dense<0.000000e+00> : vector<16xf32>
    %14 = vector.multi_reduction <add>, %13, %cst_12 [1] : vector<16x512xf32> to vector<16xf32>
    %15 = vector.shape_cast %14 : vector<16xf32> to vector<16x1xf32>
    %16 = arith.addf %12, %15 : vector<16x1xf32>
    %c0_13 = arith.constant 0 : index
    %c0_14 = arith.constant 0 : index
    %17 = vector.load %arg6[%c0_13, %c0_14] : memref<16x1xf32, #tpu.memory_space<vmem>>, vector<16x1xf32>
    tpu.vector_store %arg6[%c0_13, %c0_14], %16 {strides = array<i32>} : memref<16x1xf32, #tpu.memory_space<vmem>>, vector<16x1xf32>,
    %c512_i32 = arith.constant 512 : i32
    %18 = arith.muli %arg1, %c512_i32 : i32
    %19 = tpu.assume_multiple %18, 128 : i32
    %c0_15 = arith.constant 0 : index
    %c0_16 = arith.constant 0 : index
    %20 = arith.index_cast %19 : i32 to index
    %21 = vector.load %arg4[%c0_15, %c0_16, %20] : memref<1x16x512xf32, #tpu.memory_space<vmem>>, vector<1x16x512xf32>
    %22 = vector.shape_cast %21 : vector<1x16x512xf32> to vector<16x512xf32>
    %23 = vector.shape_cast %6 : vector<16x512xf32> to vector<1x16x512xf32>
    tpu.vector_store %arg4[%c0_15, %c0_16, %20], %23 {strides = array<i32>} : memref<1x16x512xf32, #tpu.memory_space<vmem>>, vector<1x16x512xf32>,
    %c0_i32_17 = arith.constant 0 : i32
    %24 = arith.cmpi eq, %arg1, %c0_i32_17 : i32
    %25 = arith.extui %24 : i1 to i32
    %c0_i32_18 = arith.constant 0 : i32
    %26 = arith.cmpi ne, %25, %c0_i32_18 : i32
    scf.if %26 {
      %c0_19 = arith.constant 0 : index
      %c0_20 = arith.constant 0 : index
      %27 = vector.load %arg5[%c0_19, %c0_20] : memref<16x1xf32, #tpu.memory_space<vmem>>, vector<16x1xf32>
      %cst_21 = arith.constant 0.001953125 : f32
      %28 = vector.broadcast %cst_21 : f32 to vector<16x1xf32>
      %29 = arith.mulf %27, %28 : vector<16x1xf32>
      %c0_22 = arith.constant 0 : index
      %c0_23 = arith.constant 0 : index
      %30 = vector.load %arg6[%c0_22, %c0_23] : memref<16x1xf32, #tpu.memory_space<vmem>>, vector<16x1xf32>
      %cst_24 = arith.constant 0.001953125 : f32
      %31 = vector.broadcast %cst_24 : f32 to vector<16x1xf32>
      %32 = arith.mulf %30, %31 : vector<16x1xf32>
      %33 = arith.mulf %29, %29 : vector<16x1xf32>
      %34 = arith.subf %32, %33 : vector<16x1xf32>
      %cst_25 = arith.constant 0.000000e+00 : f32
      %35 = vector.broadcast %cst_25 : f32 to vector<16x1xf32>
      %36 = arith.maximumf %34, %35 : vector<16x1xf32>
      %cst_26 = arith.constant 9.99999974E-6 : f32
      %37 = vector.broadcast %cst_26 : f32 to vector<16x1xf32>
      %38 = arith.addf %36, %37 : vector<16x1xf32>
      %39 = math.rsqrt %38 : vector<16x1xf32>
      %cst_27 = arith.constant 0.000000e+00 : f32
      %40 = vector.broadcast %cst_27 : f32 to vector<16x1xf32>
      %41 = arith.subf %40, %29 : vector<16x1xf32>
      %42 = arith.mulf %41, %39 : vector<16x1xf32>
      %c0_28 = arith.constant 0 : index
      %c0_29 = arith.constant 0 : index
      %c0_30 = arith.constant 0 : index
      %43 = vector.load %arg4[%c0_28, %c0_29, %c0_30] : memref<1x16x512xf32, #tpu.memory_space<vmem>>, vector<1x16x512xf32>
      %44 = vector.shape_cast %43 : vector<1x16x512xf32> to vector<16x512xf32>
      %45 = vector.broadcast %39 : vector<16x1xf32> to vector<16x512xf32>
      %46 = arith.mulf %44, %45 : vector<16x512xf32>
      %47 = vector.broadcast %42 : vector<16x1xf32> to vector<16x512xf32>
      %48 = arith.addf %46, %47 : vector<16x512xf32>
      %cst_31 = arith.constant 0.000000e+00 : f32
      %49 = vector.broadcast %cst_31 : f32 to vector<16x512xf32>
      %50 = arith.maximumf %48, %49 : vector<16x512xf32>
      %c0_32 = arith.constant 0 : index
      %c0_33 = arith.constant 0 : index
      %c0_34 = arith.constant 0 : index
      %51 = vector.load %arg4[%c0_32, %c0_33, %c0_34] : memref<1x16x512xf32, #tpu.memory_space<vmem>>, vector<1x16x512xf32>
      %52 = vector.shape_cast %51 : vector<1x16x512xf32> to vector<16x512xf32>
      %53 = vector.shape_cast %50 : vector<16x512xf32> to vector<1x16x512xf32>
      tpu.vector_store %arg4[%c0_32, %c0_33, %c0_34], %53 {strides = array<i32>} : memref<1x16x512xf32, #tpu.memory_space<vmem>>, vector<1x16x512xf32>,
    } else {
    }
    return
  }
  func.func @transform_0(%arg0: i32, %arg1: i32) -> (i32, i32, i32) {
    %c0_i32 = arith.constant 0 : i32
    %c0_i32_0 = arith.constant 0 : i32
    return %arg0, %c0_i32, %arg1 : i32, i32, i32
  }
  func.func @transform_1(%arg0: i32, %arg1: i32) -> (i32, i32) {
    %c0_i32 = arith.constant 0 : i32
    %c0_i32_0 = arith.constant 0 : i32
    %c0_i32_1 = arith.constant 0 : i32
    return %c0_i32, %c0_i32_0 : i32, i32
  }
  func.func @transform_2(%arg0: i32, %arg1: i32) -> (i32, i32, i32) {
    %c0_i32 = arith.constant 0 : i32
    %c0_i32_0 = arith.constant 0 : i32
    %c0_i32_1 = arith.constant 0 : i32
    return %arg0, %c0_i32, %c0_i32_0 : i32, i32, i32
  }
}

</mosaic_0001>

<llo_original>
// kernel: tpu_custom_call.1
$region0: #{tpu_custom_call.1}
  #allocation0 [shape = 'u32[]', space=smem, size = 0x4, offset = 0x4, fixed_abs, tag = 'smem constant byte address 0x4 - core index']
  #allocation1 [shape = 'u32[144,128]{1,0:T(1,128)}', space=vmem, size = 0x12000, scoped, tag = 'internal scratch']
  #allocation2 [shape = 'f32[16,1]{1,0:T(8,128)}', space=vmem, size = 0x2000, scoped, tag = 'scratch operand']
  #allocation3 [shape = 'f32[16,1]{1,0:T(8,128)}', space=vmem, size = 0x2000, scoped, tag = 'scratch operand']
  %s0 = inlined_call_operand.hbm [shape: bf16[2,128,512], index: 0, kind: input, shape index: {}]
  %s1 = inlined_call_operand.hbm [shape: bf16[16,128], index: 1, kind: input, shape index: {}]
  %s2 = inlined_call_operand.hbm [shape: f32[2,16,512], index: 2, kind: output, shape index: {}]
  %s3 = sld [smem:[#allocation0]]
  $region57: #{tpu_custom_call.1} parent=0
    _
  %s5 = ssub.s32 1, %s3
  %s6 = scalar_select 0, %s5, %s3
  $region1: #{tpu_custom_call.1} parent=0
    #allocation4 [shape = 'u8[262144]{0}', space=vmem, size = 0x40000, scoped, tag = 'input window, operand 0']
    #allocation5 [shape = 's32[2]{0}', space=sflag, size = 0x8, scoped, tag = 'scoped memory for tpu_custom_call.1']
    #allocation6 [shape = 's32[2]{0}', space=sflag, size = 0x8, scoped, tag = 'scoped memory for tpu_custom_call.1']
    #allocation7 [shape = 'u8[4096]{0}', space=vmem, size = 0x1000, scoped, tag = 'input window, operand 1, single buffered']
    #allocation8 [shape = 's32[1]{0}', space=sflag, size = 0x4, scoped, tag = 'scoped memory for tpu_custom_call.1']
    #allocation9 [shape = 'u8[65536]{0}', space=vmem, size = 0x10000, scoped, tag = 'output window, operand 0']
    %7 = vsyncpa [#allocation5], 0
    %s8 = scalar_lea.sflag [#allocation5], 1
    %9 = vsyncpa %s8, 0
    %10 = vsyncpa [#allocation8], 0
    %11 = vsyncpa [#allocation6], 0
    %s12 = scalar_lea.sflag [#allocation6], 1
    %13 = vsyncpa %s12, 0
    loop: start=0, step=1, limit=4
    $region2: #{tpu_custom_call.1} parent=1 // loop_pre_header
      _
    $region3: #{tpu_custom_call.1} parent=1 // loop_header
      %s15 = sphi 0, %s19
      %p16 = scmp.ge.s32.totalorder %s15, 4
      %s22 = sphi 0, %s34
      %s23 = sphi 0, %s30
      %s24 = sphi 0, %s22
      %s25 = sphi 0, %s23
      %s26 = sphi 0, %s24
      %s27 = sphi 0, %s25
      %s39 = sphi 0, %s41
      %s42 = sphi 0, %s39
      %s43 = sphi 0, %s42
      %s59 = sphi 0, %s43
      %s63 = sphi 0, %s63
      %s65 = sphi 0, %s63
      %s66 = sphi 0, %s65
      %s80 = sphi 0, %s66
      %s86 = sphi 0, %s88
      %s89 = sphi 0, %s86
      %s90 = sphi 0, %s89
      %s106 = sphi 0, %s90
    $region4: #{tpu_custom_call.1} parent=1 // loop_header_branch
      %18 = sbr.rel (%p16) target = $region8
    $region5: #{tpu_custom_call.1} parent=1 // loop_body
      %s20 = ssub.s32 %s15, 1
      %s21 = ssub.s32 %s15, 2
      %s28 = sadd.s32 1, %s23
      %p29 = scmp.ge.s32.totalorder %s28, 1
      %s30 = scalar_select %p29, 0, %s28
      %s31 = sadd.s32 1, %s22
      %s32 = scalar_select %p29, %s31, %s22
      %p33 = scmp.ge.s32.totalorder %s32, 2
      %s34 = scalar_select %p33, 0, %s32
      %s35 = ssub.s32 %s22, %s34
      %s36 = ssub.s32 %s23, %s30
      %s37 = sor.u32 %s35, %s36
      %p38 = scmp.eq.s32.totalorder %s37, 0
      %s40 = sadd.s32 %s39, 1
      %s41 = scalar_select %p38, %s39, %s40
      %p44 = pneg %p38
      %p45 = scmp.eq.s32.totalorder %s15, 1
      %p46 = por %p44, %p45
      %p47 = scmp.ne.s32.totalorder %s39, %s42
      %p48 = scmp.eq.s32.totalorder %s15, 0
      %p49 = por %p47, %p48
      %p50 = scmp.ne.s32.totalorder %s39, %s42
      %p51 = scmp.eq.s32.totalorder %s20, 1
      %p52 = por %p50, %p51
      %p53 = scmp.ne.s32.totalorder %s42, %s43
      %p54 = scmp.eq.s32.totalorder %s20, 0
      %p55 = por %p53, %p54
      %p56 = scmp.ne.s32.totalorder %s42, %s43
      %p57 = scmp.eq.s32.totalorder %s21, 1
      %p58 = por %p56, %p57
      %p60 = scmp.ne.s32.totalorder %s43, %s59
      %p61 = scmp.eq.s32.totalorder %s21, 0
      %p62 = por %p60, %p61
      %s64 = sadd.s32 %s63, 1
      %p67 = scmp.eq.s32.totalorder %s15, 1
      %p68 = scmp.ne.s32.totalorder %s63, %s65
      %p69 = scmp.eq.s32.totalorder %s15, 0
      %p70 = por %p68, %p69
      %p71 = scmp.ne.s32.totalorder %s63, %s65
      %p72 = scmp.eq.s32.totalorder %s20, 1
      %p73 = por %p71, %p72
      %p74 = scmp.ne.s32.totalorder %s65, %s66
      %p75 = scmp.eq.s32.totalorder %s20, 0
      %p76 = por %p74, %p75
      %p77 = scmp.ne.s32.totalorder %s65, %s66
      %p78 = scmp.eq.s32.totalorder %s21, 1
      %p79 = por %p77, %p78
      %p81 = scmp.ne.s32.totalorder %s66, %s80
      %p82 = scmp.eq.s32.totalorder %s21, 0
      %p83 = por %p81, %p82
      %s84 = ssub.s32 %s22, %s34
      %p85 = scmp.eq.s32.totalorder %s84, 0
      %s87 = sadd.s32 %s86, 1
      %s88 = scalar_select %p85, %s86, %s87
      %p91 = pneg %p85
      %p92 = scmp.eq.s32.totalorder %s15, 1
      %p93 = por %p91, %p92
      %p94 = scmp.ne.s32.totalorder %s86, %s89
      %p95 = scmp.eq.s32.totalorder %s15, 0
      %p96 = por %p94, %p95
      %p97 = scmp.ne.s32.totalorder %s86, %s89
      %p98 = scmp.eq.s32.totalorder %s20, 1
      %p99 = por %p97, %p98
      %p100 = scmp.ne.s32.totalorder %s89, %s90
      %p101 = scmp.eq.s32.totalorder %s20, 0
      %p102 = por %p100, %p101
      %p103 = scmp.ne.s32.totalorder %s89, %s90
      %p104 = scmp.eq.s32.totalorder %s21, 1
      %p105 = por %p103, %p104
      %p107 = scmp.ne.s32.totalorder %s90, %s106
      %p108 = scmp.eq.s32.totalorder %s21, 0
      %p109 = por %p107, %p108
      %p110 = scmp.le.s32.totalorder 1, %s15
      %p111 = scmp.lt.s32.totalorder %s15, 3
      %p112 = pnand %p110, %p111
      %p113 = pneg %p112
      // Predicated region
      $region9: #{tpu_custom_call.1} parent=5 // pred_check
        _
      $region10: #{tpu_custom_call.1} parent=5 // pred_check_branch
        %115 = sbr.rel (%p112) target = $region12
      $region11: #{tpu_custom_call.1} parent=5 // pred_region
        %s116 = ssub.s32 %s15, 1
        // Predicated region
        $region13: #{tpu_custom_call.1} parent=11 // pred_check
          %p117 = pneg %p76
        $region14: #{tpu_custom_call.1} parent=11 // pred_check_branch
          %119 = sbr.rel (%p117) target = $region16
        $region15: #{tpu_custom_call.1} parent=11 // pred_region
          %s121 = ssub.s32 128, 128
          %122 = vsyncadd [#allocation8], %s121
          %s123 = sshll.u32 [#allocation7], 4
          %s124 = int_to_ptr.vmem [resolvable:$true] %s123
          %129 = dma.hbm_to_vmem [thread:$0]  %s1, 128, %s124, [#allocation8], 64, 64, 4
        $region16: #{tpu_custom_call.1} parent=11 // pred_fallthru
          _
      $region12: #{tpu_custom_call.1} parent=5 // pred_fallthru
        _
      %p130 = scmp.lt.s32.totalorder %s15, 2
      // Predicated region
      $region17: #{tpu_custom_call.1} parent=5 // pred_check
        %p131 = pneg %p130
      $region18: #{tpu_custom_call.1} parent=5 // pred_check_branch
        %133 = sbr.rel (%p131) target = $region20
      $region19: #{tpu_custom_call.1} parent=5 // pred_region
        // Predicated region
        $region21: #{tpu_custom_call.1} parent=19 // pred_check
          %p134 = pneg %p49
        $region22: #{tpu_custom_call.1} parent=19 // pred_check_branch
          %136 = sbr.rel (%p134) target = $region24
        $region23: #{tpu_custom_call.1} parent=19 // pred_region
          %s137 = sand.u32 %s39, 1
          %s138 = scalar_lea.sflag [#allocation5], %s137
          %s139 = sand.u32 %s39, 1
          %s140 = smul.addr %s139, 256
          %s141 = scalar_lea.vmem [#allocation4], %s140
          %s142 = smul.u32 4, %s23
          %s144 = ssub.s32 4096, 4096
          %145 = vsyncadd %s138, %s144
          %s146 = smul.addr %s22, 64
          %s147 = sadd.s32 %s142, %s146
          %s148 = smul.addr %s147, 64
          %s149 = scalar_lea.hbm %s0, %s148
          %s150 = sshll.u32 %s141, 4
          %s151 = int_to_ptr.vmem [resolvable:$true] %s150
          %156 = dma.hbm_to_vmem [thread:$0]  %s149, 4096, %s151, %s138, 256, 256, 16
        $region24: #{tpu_custom_call.1} parent=19 // pred_fallthru
          _
      $region20: #{tpu_custom_call.1} parent=5 // pred_fallthru
        _
      %p157 = scmp.le.s32.totalorder 1, %s15
      %p158 = scmp.lt.s32.totalorder %s15, 3
      %p159 = pnand %p157, %p158
      %p160 = pneg %p159
      // Predicated region
      $region25: #{tpu_custom_call.1} parent=5 // pred_check
        _
      $region26: #{tpu_custom_call.1} parent=5 // pred_check_branch
        %162 = sbr.rel (%p159) target = $region28
      $region27: #{tpu_custom_call.1} parent=5 // pred_region
        %s163 = ssub.s32 %s15, 1
        %s164 = sand.u32 %s42, 1
        %s165 = scalar_lea.sflag [#allocation5], %s164
        %s166 = sand.u32 %s42, 1
        %s167 = smul.addr %s166, 256
        %s168 = scalar_lea.vmem [#allocation4], %s167
        // Predicated region
        $region29: #{tpu_custom_call.1} parent=27 // pred_check
          %p169 = pneg %p55
        $region30: #{tpu_custom_call.1} parent=27 // pred_check_branch
          %171 = sbr.rel (%p169) target = $region32
        $region31: #{tpu_custom_call.1} parent=27 // pred_region
          %172 = dma.done %s165, 4096
        $region32: #{tpu_custom_call.1} parent=27 // pred_fallthru
          _
        // Predicated region
        $region33: #{tpu_custom_call.1} parent=27 // pred_check
          %p173 = pneg %p76
        $region34: #{tpu_custom_call.1} parent=27 // pred_check_branch
          %175 = sbr.rel (%p173) target = $region36
        $region35: #{tpu_custom_call.1} parent=27 // pred_region
          %176 = dma.done [#allocation8], 128
        $region36: #{tpu_custom_call.1} parent=27 // pred_fallthru
          _
        %s177 = sand.u32 %s42, 1
        %s178 = scalar_lea.sflag [#allocation5], %s177
        %s179 = sand.u32 %s42, 1
        %s180 = smul.addr %s179, 256
        %s181 = scalar_lea.vmem [#allocation4], %s180
        %p182 = pneg %p55
        %p183 = pneg %p52
        %p184 = pneg %p76
        %p185 = pneg %p73
        %p186 = pneg %p102
        %p187 = pneg %p99
        %s188 = sand.u32 %s89, 1
        %s189 = scalar_lea.sflag [#allocation6], %s188
        %s190 = sand.u32 %s89, 1
        %s191 = smul.addr %s190, 64
        %s192 = scalar_lea.vmem [#allocation9], %s191
        %s193 = smul.u32 4, %s25
        %p195 = scmp.eq.s32.totalorder %s25, 0
        // Predicated region
        $region37: #{tpu_custom_call.1} parent=27 // pred_check
          %p196 = pneg %p195
        $region38: #{tpu_custom_call.1} parent=27 // pred_check_branch
          %198 = sbr.rel (%p196) target = $region40
        $region39: #{tpu_custom_call.1} parent=27 // pred_region
          %vm199 = vcmask 7168
          %200 = vst.msk [vmem:[#allocation2] sm:$0xff] %vm199, 0.0
          %201 = vst.msk [vmem:[#allocation2 + $0x8] sm:$0xff] %vm199, 0.0
          %202 = vst.msk [vmem:[#allocation3] sm:$0xff] %vm199, 0.0
          %203 = vst.msk [vmem:[#allocation3 + $0x8] sm:$0xff] %vm199, 0.0
        $region40: #{tpu_custom_call.1} parent=27 // pred_fallthru
          _
        %v204 = vld [vmem:[#allocation7] sm:$0xf]
        %v205 = vld [vmem:[#allocation7 + $0x4] sm:$0xf]
        %v206 = vld [vmem:[%s168] sm:$0xff]
        %v207 = vld [vmem:[%s168 + $0x8] sm:$0xff]
        %v208 = vld [vmem:[%s168 + $0x10] sm:$0xff]
        %v209 = vld [vmem:[%s168 + $0x18] sm:$0xff]
        %v210 = vld [vmem:[%s168 + $0x20] sm:$0xff]
        %v211 = vld [vmem:[%s168 + $0x28] sm:$0xff]
        %v212 = vld [vmem:[%s168 + $0x30] sm:$0xff]
        %v213 = vld [vmem:[%s168 + $0x38] sm:$0xff]
        %v214 = vld [vmem:[%s168 + $0x40] sm:$0xff]
        %v215 = vld [vmem:[%s168 + $0x48] sm:$0xff]
        %v216 = vld [vmem:[%s168 + $0x50] sm:$0xff]
        %v217 = vld [vmem:[%s168 + $0x58] sm:$0xff]
        %v218 = vld [vmem:[%s168 + $0x60] sm:$0xff]
        %v219 = vld [vmem:[%s168 + $0x68] sm:$0xff]
        %v220 = vld [vmem:[%s168 + $0x70] sm:$0xff]
        %v221 = vld [vmem:[%s168 + $0x78] sm:$0xff]
        %v222 = vld [vmem:[%s168 + $0x80] sm:$0xff]
        %v223 = vld [vmem:[%s168 + $0x88] sm:$0xff]
        %v224 = vld [vmem:[%s168 + $0x90] sm:$0xff]
        %v225 = vld [vmem:[%s168 + $0x98] sm:$0xff]
        %v226 = vld [vmem:[%s168 + $0xa0] sm:$0xff]
        %v227 = vld [vmem:[%s168 + $0xa8] sm:$0xff]
        %v228 = vld [vmem:[%s168 + $0xb0] sm:$0xff]
        %v229 = vld [vmem:[%s168 + $0xb8] sm:$0xff]
        %v230 = vld [vmem:[%s168 + $0xc0] sm:$0xff]
        %v231 = vld [vmem:[%s168 + $0xc8] sm:$0xff]
        %v232 = vld [vmem:[%s168 + $0xd0] sm:$0xff]
        %v233 = vld [vmem:[%s168 + $0xd8] sm:$0xff]
        %v234 = vld [vmem:[%s168 + $0xe0] sm:$0xff]
        %v235 = vld [vmem:[%s168 + $0xe8] sm:$0xff]
        %v236 = vld [vmem:[%s168 + $0xf0] sm:$0xff]
        %v237 = vld [vmem:[%s168 + $0xf8] sm:$0xff]
        %v240 = vunpack.c.l.b16 %v204
        %v241 = vunpack.c.l.b16 %v205
        %v242 = vpack.c.b16 %v241, %v240
        %v276 = vunpack.c.l.b16 %v206
        %v277 = vunpack.c.h.b16 %v206
        %v278 = vunpack.c.l.b16 %v207
        %v279 = vunpack.c.h.b16 %v207
        %v280 = vunpack.c.l.b16 %v208
        %v281 = vunpack.c.h.b16 %v208
        %v282 = vunpack.c.l.b16 %v209
        %v283 = vunpack.c.h.b16 %v209
        %v284 = vunpack.c.l.b16 %v210
        %v285 = vunpack.c.h.b16 %v210
        %v286 = vunpack.c.l.b16 %v211
        %v287 = vunpack.c.h.b16 %v211
        %v288 = vunpack.c.l.b16 %v212
        %v289 = vunpack.c.h.b16 %v212
        %v290 = vunpack.c.l.b16 %v213
        %v291 = vunpack.c.h.b16 %v213
        %v292 = vunpack.c.l.b16 %v214
        %v293 = vunpack.c.h.b16 %v214
        %v294 = vunpack.c.l.b16 %v215
        %v295 = vunpack.c.h.b16 %v215
        %v296 = vunpack.c.l.b16 %v216
        %v297 = vunpack.c.h.b16 %v216
        %v298 = vunpack.c.l.b16 %v217
        %v299 = vunpack.c.h.b16 %v217
        %v300 = vunpack.c.l.b16 %v218
        %v301 = vunpack.c.h.b16 %v218
        %v302 = vunpack.c.l.b16 %v219
        %v303 = vunpack.c.h.b16 %v219
        %v304 = vunpack.c.l.b16 %v220
        %v305 = vunpack.c.h.b16 %v220
        %v306 = vunpack.c.l.b16 %v221
        %v307 = vunpack.c.h.b16 %v221
        %v308 = vunpack.c.l.b16 %v222
        %v309 = vunpack.c.h.b16 %v222
        %v310 = vunpack.c.l.b16 %v223
        %v311 = vunpack.c.h.b16 %v223
        %v312 = vunpack.c.l.b16 %v224
        %v313 = vunpack.c.h.b16 %v224
        %v314 = vunpack.c.l.b16 %v225
        %v315 = vunpack.c.h.b16 %v225
        %v316 = vunpack.c.l.b16 %v226
        %v317 = vunpack.c.h.b16 %v226
        %v318 = vunpack.c.l.b16 %v227
        %v319 = vunpack.c.h.b16 %v227
        %v320 = vunpack.c.l.b16 %v228
        %v321 = vunpack.c.h.b16 %v228
        %v322 = vunpack.c.l.b16 %v229
        %v323 = vunpack.c.h.b16 %v229
        %v324 = vunpack.c.l.b16 %v230
        %v325 = vunpack.c.h.b16 %v230
        %v326 = vunpack.c.l.b16 %v231
        %v327 = vunpack.c.h.b16 %v231
        %v328 = vunpack.c.l.b16 %v232
        %v329 = vunpack.c.h.b16 %v232
        %v330 = vunpack.c.l.b16 %v233
        %v331 = vunpack.c.h.b16 %v233
        %v332 = vunpack.c.l.b16 %v234
        %v333 = vunpack.c.h.b16 %v234
        %v334 = vunpack.c.l.b16 %v235
        %v335 = vunpack.c.h.b16 %v235
        %v336 = vunpack.c.l.b16 %v236
        %v337 = vunpack.c.h.b16 %v236
        %v338 = vunpack.c.l.b16 %v237
        %v339 = vunpack.c.h.b16 %v237
        %v340 = vpack.c.b16 %v280, %v276
        %v341 = vpack.c.b16 %v281, %v277
        %v342 = vpack.c.b16 %v282, %v278
        %v343 = vpack.c.b16 %v283, %v279
        %v344 = vpack.c.b16 %v288, %v284
        %v345 = vpack.c.b16 %v289, %v285
        %v346 = vpack.c.b16 %v290, %v286
        %v347 = vpack.c.b16 %v291, %v287
        %v348 = vpack.c.b16 %v296, %v292
        %v349 = vpack.c.b16 %v297, %v293
        %v350 = vpack.c.b16 %v298, %v294
        %v351 = vpack.c.b16 %v299, %v295
        %v352 = vpack.c.b16 %v304, %v300
        %v353 = vpack.c.b16 %v305, %v301
        %v354 = vpack.c.b16 %v306, %v302
        %v355 = vpack.c.b16 %v307, %v303
        %v356 = vpack.c.b16 %v312, %v308
        %v357 = vpack.c.b16 %v313, %v309
        %v358 = vpack.c.b16 %v314, %v310
        %v359 = vpack.c.b16 %v315, %v311
        %v360 = vpack.c.b16 %v320, %v316
        %v361 = vpack.c.b16 %v321, %v317
        %v362 = vpack.c.b16 %v322, %v318
        %v363 = vpack.c.b16 %v323, %v319
        %v364 = vpack.c.b16 %v328, %v324
        %v365 = vpack.c.b16 %v329, %v325
        %v366 = vpack.c.b16 %v330, %v326
        %v367 = vpack.c.b16 %v331, %v327
        %v368 = vpack.c.b16 %v336, %v332
        %v369 = vpack.c.b16 %v337, %v333
        %v370 = vpack.c.b16 %v338, %v334
        %v371 = vpack.c.b16 %v339, %v335
        %404 = vmatprep.subr.bf16.mxu0 %v341
        %405 = vmatpush1.bf16.msra.mxu0 %v340
        %406 = vmatprep.subr.bf16.mxu0 %v345
        %407 = vmatpush1.bf16.msra.mxu0 %v344
        %408 = vmatprep.subr.bf16.mxu0 %v349
        %409 = vmatpush1.bf16.msra.mxu0 %v348
        %410 = vmatprep.subr.bf16.mxu0 %v353
        %411 = vmatpush1.bf16.msra.mxu0 %v352
        %412 = vmatprep.subr.bf16.mxu0 %v357
        %413 = vmatpush1.bf16.msra.mxu0 %v356
        %414 = vmatprep.subr.bf16.mxu0 %v361
        %415 = vmatpush1.bf16.msra.mxu0 %v360
        %416 = vmatprep.subr.bf16.mxu0 %v365
        %417 = vmatpush1.bf16.msra.mxu0 %v364
        %418 = vmatprep.subr.bf16.mxu0 %v369
        %419 = vmatpush1.bf16.msra.mxu0 %v368
        %420 = vmatprep.subr.bf16.mxu0 0
        %421 = vmatpush1.bf16.msra.mxu0 0
        %422 = vmatprep.subr.bf16.mxu0 0
        %423 = vmatpush1.bf16.msra.mxu0 0
        %424 = vmatprep.subr.bf16.mxu0 0
        %425 = vmatpush1.bf16.msra.mxu0 0
        %426 = vmatprep.subr.bf16.mxu0 0
        %427 = vmatpush1.bf16.msra.mxu0 0
        %428 = vmatprep.subr.bf16.mxu0 0
        %429 = vmatpush1.bf16.msra.mxu0 0
        %430 = vmatprep.subr.bf16.mxu0 0
        %431 = vmatpush1.bf16.msra.mxu0 0
        %432 = vmatprep.subr.bf16.mxu0 0
        %433 = vmatpush1.bf16.msra.mxu0 0
        %434 = vmatprep.subr.bf16.mxu0 0
        %435 = vmatpush1.bf16.msra.mxu0 0
        %436 = vmatprep.mubr.bf16.mxu0 0
        %437 = vmatmul.mubr.bf16.gmra.mrb[0].mxu0 %v242
        %v438 = vpop.f32.mrb[0].mxu0
        %v439 = vadd.f32 0.0, %v438
        %v440 = vpop.f32.mrb[0].mxu0
        %v441 = vadd.f32 0.0, %v440
        %v442 = vpop.f32.mrb[0].mxu0
        %v443 = vadd.f32 0.0, %v442
        %v444 = vpop.f32.mrb[0].mxu0
        %v445 = vadd.f32 0.0, %v444
        %446 = vdwg.mxu0
        %447 = vmatprep.subr.bf16.mxu0 %v343
        %448 = vmatpush1.bf16.msra.mxu0 %v342
        %449 = vmatprep.subr.bf16.mxu0 %v347
        %450 = vmatpush1.bf16.msra.mxu0 %v346
        %451 = vmatprep.subr.bf16.mxu0 %v351
        %452 = vmatpush1.bf16.msra.mxu0 %v350
        %453 = vmatprep.subr.bf16.mxu0 %v355
        %454 = vmatpush1.bf16.msra.mxu0 %v354
        %455 = vmatprep.subr.bf16.mxu0 %v359
        %456 = vmatpush1.bf16.msra.mxu0 %v358
        %457 = vmatprep.subr.bf16.mxu0 %v363
        %458 = vmatpush1.bf16.msra.mxu0 %v362
        %459 = vmatprep.subr.bf16.mxu0 %v367
        %460 = vmatpush1.bf16.msra.mxu0 %v366
        %461 = vmatprep.subr.bf16.mxu0 %v371
        %462 = vmatpush1.bf16.msra.mxu0 %v370
        %463 = vmatprep.subr.bf16.mxu0 0
        %464 = vmatpush1.bf16.msra.mxu0 0
        %465 = vmatprep.subr.bf16.mxu0 0
        %466 = vmatpush1.bf16.msra.mxu0 0
        %467 = vmatprep.subr.bf16.mxu0 0
        %468 = vmatpush1.bf16.msra.mxu0 0
        %469 = vmatprep.subr.bf16.mxu0 0
        %470 = vmatpush1.bf16.msra.mxu0 0
        %471 = vmatprep.subr.bf16.mxu0 0
        %472 = vmatpush1.bf16.msra.mxu0 0
        %473 = vmatprep.subr.bf16.mxu0 0
        %474 = vmatpush1.bf16.msra.mxu0 0
        %475 = vmatprep.subr.bf16.mxu0 0
        %476 = vmatpush1.bf16.msra.mxu0 0
        %477 = vmatprep.subr.bf16.mxu0 0
        %478 = vmatpush1.bf16.msra.mxu0 0
        %479 = vmatprep.mubr.bf16.mxu0 0
        %480 = vmatmul.mubr.bf16.gmra.mrb[0].mxu0 %v242
        %v481 = vpop.f32.mrb[0].mxu0
        %v482 = vadd.f32 0.0, %v481
        %v483 = vpop.f32.mrb[0].mxu0
        %v484 = vadd.f32 0.0, %v483
        %v485 = vpop.f32.mrb[0].mxu0
        %v486 = vadd.f32 0.0, %v485
        %v487 = vpop.f32.mrb[0].mxu0
        %v488 = vadd.f32 0.0, %v487
        %489 = vdwg.mxu0
        %v490 = vld [vmem:[#allocation2] sm:$0xff]
        %v491 = vld [vmem:[#allocation2 + $0x8] sm:$0xff]
        %v492 = vadd.f32 %v439, %v441
        %v493 = vadd.f32 %v492, %v482
        %v494 = vadd.f32 %v493, %v484
        %495 = vadd.xlane.f32.xlu0 %v494
        %v496 = vpop.xlane.xlu0 %495
        %v497 = vadd.f32 %v443, %v445
        %v498 = vadd.f32 %v497, %v486
        %v499 = vadd.f32 %v498, %v488
        %500 = vadd.xlane.f32.xlu0 %v499
        %v501 = vpop.xlane.xlu0 %500
        %v502 = vadd.f32 %v490, %v496
        %v503 = vadd.f32 %v491, %v501
        %vm504 = vcmask 7168
        %505 = vst.msk [vmem:[#allocation2] sm:$0xff] %vm504, %v502
        %506 = vst.msk [vmem:[#allocation2 + $0x8] sm:$0xff] %vm504, %v503
        %v507 = vld [vmem:[#allocation3] sm:$0xff]
        %v508 = vld [vmem:[#allocation3 + $0x8] sm:$0xff]
        %v509 = vmul.f32 %v439, %v439
        %v510 = vmul.f32 %v441, %v441
        %v511 = vmul.f32 %v482, %v482
        %v512 = vmul.f32 %v484, %v484
        %v513 = vmul.f32 %v443, %v443
        %v514 = vmul.f32 %v445, %v445
        %v515 = vmul.f32 %v486, %v486
        %v516 = vmul.f32 %v488, %v488
        %v517 = vadd.f32 %v509, %v510
        %v518 = vadd.f32 %v517, %v511
        %v519 = vadd.f32 %v518, %v512
        %520 = vadd.xlane.f32.xlu0 %v519
        %v521 = vpop.xlane.xlu0 %520
        %v522 = vadd.f32 %v513, %v514
        %v523 = vadd.f32 %v522, %v515
        %v524 = vadd.f32 %v523, %v516
        %525 = vadd.xlane.f32.xlu0 %v524
        %v526 = vpop.xlane.xlu0 %525
        %v527 = vadd.f32 %v507, %v521
        %v528 = vadd.f32 %v508, %v526
        %529 = vst.msk [vmem:[#allocation3] sm:$0xff] %vm504, %v527
        %530 = vst.msk [vmem:[#allocation3 + $0x8] sm:$0xff] %vm504, %v528
        %s531 = smul.u32 %s25, 512
        %s532 = sshra.s32 %s531, 7
        %s533 = sand.u32 %s531, 127
        %s534 = smul.addr %s532, 8
        %s535 = scalar_lea.vmem %s192, %s534 [#allocation9]
        %536 = vst [vmem:[%s535] sm:$0xff] %v439
        %537 = vst [vmem:[%s535 + $0x8] sm:$0xff] %v441
        %538 = vst [vmem:[%s535 + $0x10] sm:$0xff] %v482
        %539 = vst [vmem:[%s535 + $0x18] sm:$0xff] %v484
        %540 = vst [vmem:[%s535 + $0x20] sm:$0xff] %v443
        %541 = vst [vmem:[%s535 + $0x28] sm:$0xff] %v445
        %542 = vst [vmem:[%s535 + $0x30] sm:$0xff] %v486
        %543 = vst [vmem:[%s535 + $0x38] sm:$0xff] %v488
        // Predicated region
        $region41: #{tpu_custom_call.1} parent=27 // pred_check
          %p544 = pneg %p195
        $region42: #{tpu_custom_call.1} parent=27 // pred_check_branch
          %546 = sbr.rel (%p544) target = $region44
        $region43: #{tpu_custom_call.1} parent=27 // pred_region
          %v547 = vld [vmem:[#allocation2] sm:$0xff]
          %v548 = vld [vmem:[#allocation2 + $0x8] sm:$0xff]
          %v549 = vmul.f32 %v547, 0.001953125
          %v550 = vmul.f32 %v548, 0.001953125
          %v551 = vld [vmem:[#allocation3] sm:$0xff]
          %v552 = vld [vmem:[#allocation3 + $0x8] sm:$0xff]
          %v553 = vmul.f32 %v551, 0.001953125
          %v554 = vmul.f32 %v552, 0.001953125
          %v555 = vmul.f32 %v549, %v549
          %v556 = vmul.f32 %v550, %v550
          %v557 = vsub.f32 %v553, %v555
          %v558 = vsub.f32 %v554, %v556
          %v559 = vmax.f32 %v557, 0.0
          %v560 = vmax.f32 %v558, 0.0
          %v561 = vadd.f32 %v559, 1e-05
          %v562 = vadd.f32 %v560, 1e-05
          %v563 = vrsqrt.pop %v561
          %v564 = vrsqrt.pop %v562
          %v565 = vsub.f32 0.0, %v549
          %v566 = vsub.f32 0.0, %v550
          %v567 = vmul.f32 %v565, %v563
          %v568 = vmul.f32 %v566, %v564
          %v569 = vld [vmem:[%s192] sm:$0xff]
          %v570 = vld [vmem:[%s192 + $0x8] sm:$0xff]
          %v571 = vld [vmem:[%s192 + $0x10] sm:$0xff]
          %v572 = vld [vmem:[%s192 + $0x18] sm:$0xff]
          %v573 = vld [vmem:[%s192 + $0x20] sm:$0xff]
          %v574 = vld [vmem:[%s192 + $0x28] sm:$0xff]
          %v575 = vld [vmem:[%s192 + $0x30] sm:$0xff]
          %v576 = vld [vmem:[%s192 + $0x38] sm:$0xff]
          %578 = vset.pattern.permute.xlu0 0
          %579 = vperm.xlu0 %578, %v563
          %v580 = vpop.permute.xlu0 %579
          %583 = vset.pattern.permute.xlu0 0
          %584 = vperm.xlu0 %583, %v564
          %v585 = vpop.permute.xlu0 %584
          %v587 = vmul.f32 %v569, %v580
          %v588 = vmul.f32 %v570, %v580
          %v589 = vmul.f32 %v571, %v580
          %v590 = vmul.f32 %v572, %v580
          %v591 = vmul.f32 %v573, %v585
          %v592 = vmul.f32 %v574, %v585
          %v593 = vmul.f32 %v575, %v585
          %v594 = vmul.f32 %v576, %v585
          %596 = vset.pattern.permute.xlu0 0
          %597 = vperm.xlu0 %596, %v567
          %v598 = vpop.permute.xlu0 %597
          %601 = vset.pattern.permute.xlu0 0
          %602 = vperm.xlu0 %601, %v568
          %v603 = vpop.permute.xlu0 %602
          %v605 = vadd.f32 %v587, %v598
          %v606 = vadd.f32 %v588, %v598
          %v607 = vadd.f32 %v589, %v598
          %v608 = vadd.f32 %v590, %v598
          %v609 = vadd.f32 %v591, %v603
          %v610 = vadd.f32 %v592, %v603
          %v611 = vadd.f32 %v593, %v603
          %v612 = vadd.f32 %v594, %v603
          %v613 = vmax.f32 %v605, 0.0
          %v614 = vmax.f32 %v606, 0.0
          %v615 = vmax.f32 %v607, 0.0
          %v616 = vmax.f32 %v608, 0.0
          %v617 = vmax.f32 %v609, 0.0
          %v618 = vmax.f32 %v610, 0.0
          %v619 = vmax.f32 %v611, 0.0
          %v620 = vmax.f32 %v612, 0.0
          %621 = vst [vmem:[%s192] sm:$0xff] %v613
          %622 = vst [vmem:[%s192 + $0x8] sm:$0xff] %v614
          %623 = vst [vmem:[%s192 + $0x10] sm:$0xff] %v615
          %624 = vst [vmem:[%s192 + $0x18] sm:$0xff] %v616
          %625 = vst [vmem:[%s192 + $0x20] sm:$0xff] %v617
          %626 = vst [vmem:[%s192 + $0x28] sm:$0xff] %v618
          %627 = vst [vmem:[%s192 + $0x30] sm:$0xff] %v619
          %628 = vst [vmem:[%s192 + $0x38] sm:$0xff] %v620
        $region44: #{tpu_custom_call.1} parent=27 // pred_fallthru
          _
        %s629 = sand.u32 %s89, 1
        %s630 = scalar_lea.sflag [#allocation6], %s629
        %s631 = sand.u32 %s89, 1
        %s632 = smul.addr %s631, 64
        %s633 = scalar_lea.vmem [#allocation9], %s632
        // Predicated region
        $region45: #{tpu_custom_call.1} parent=27 // pred_check
          %p634 = pneg %p99
        $region46: #{tpu_custom_call.1} parent=27 // pred_check_branch
          %636 = sbr.rel (%p634) target = $region48
        $region47: #{tpu_custom_call.1} parent=27 // pred_region
          %s638 = ssub.s32 1024, 1024
          %639 = vsyncadd %s630, %s638
          %s640 = smul.addr %s24, 8
          %s641 = smul.addr %s640, 128
          %s642 = scalar_lea.hbm %s2, %s641
          %s643 = sshll.u32 %s633, 4
          %s644 = int_to_ptr.vmem [resolvable:$true] %s643
          %649 = dma.vmem_to_hbm [thread:$0]  %s644, 1024, %s642, %s630, 512, 512, 32
        $region48: #{tpu_custom_call.1} parent=27 // pred_fallthru
          _
      $region28: #{tpu_custom_call.1} parent=5 // pred_fallthru
        _
      %p650 = scmp.le.s32.totalorder 2, %s15
      // Predicated region
      $region49: #{tpu_custom_call.1} parent=5 // pred_check
        %p651 = pneg %p650
      $region50: #{tpu_custom_call.1} parent=5 // pred_check_branch
        %653 = sbr.rel (%p651) target = $region52
      $region51: #{tpu_custom_call.1} parent=5 // pred_region
        %s654 = ssub.s32 %s15, 2
        // Predicated region
        $region53: #{tpu_custom_call.1} parent=51 // pred_check
          %p655 = pneg %p105
        $region54: #{tpu_custom_call.1} parent=51 // pred_check_branch
          %657 = sbr.rel (%p655) target = $region56
        $region55: #{tpu_custom_call.1} parent=51 // pred_region
          %s658 = sand.u32 %s90, 1
          %s659 = scalar_lea.sflag [#allocation6], %s658
          %s660 = sand.u32 %s90, 1
          %s661 = smul.addr %s660, 64
          %s662 = scalar_lea.vmem [#allocation9], %s661
          %663 = dma.done %s659, 1024
        $region56: #{tpu_custom_call.1} parent=51 // pred_fallthru
          _
      $region52: #{tpu_custom_call.1} parent=5 // pred_fallthru
        _
    $region6: #{tpu_custom_call.1} parent=1 // loop_footer
      %s19 = sadd.s32 1, %s15
    $region7: #{tpu_custom_call.1} parent=1 // loop_footer_branch
      %14 = sbr.rel target = $region3
    $region8: #{tpu_custom_call.1} parent=1 // loop_exit
      _
    %664 = vsyncpa [#allocation5], 1
    %s665 = scalar_lea.sflag [#allocation5], 1
    %666 = vsyncpa %s665, 1
    %667 = vsyncpa [#allocation8], 1
    %668 = vsyncpa [#allocation6], 1
    %s669 = scalar_lea.sflag [#allocation6], 1
    %670 = vsyncpa %s669, 1

</llo_original>
